<compile_context>
chip_gen: v5e
topology: v5e:2x2
jax: 0.10.0
libtpu: 0.0.40
codegen_flags: <defaults>
</compile_context>

<pallas_src>
import jax
import jax.numpy as jnp
from jax.experimental import pallas as pl
from jax.experimental.pallas import tpu as pltpu


# ---------------------------------------------------------------------------
# Primary path: whole table resident in VMEM, one kernel invocation.
# ---------------------------------------------------------------------------
def _vmem_gather_kernel(labels_ref, table_ref, out_ref):
    """out[i, :] = table[labels[i], 0, :] for all i, in one grid step.

    labels_ref: SMEM (B,) int32  -- gather indices.
    table_ref:  VMEM (V, 1, E)   -- full embedding table, one row per leading idx.
    out_ref:    VMEM (B, E)      -- gathered rows.
    """
    batch = out_ref.shape[0]
    # Fully-unrolled static loop: store row index is static; the table row
    # index is a dynamic *leading-dim* index (plain VMEM address offset), so
    # there is no dynamic sublane slicing anywhere.
    for i in range(batch):
        out_ref[pl.ds(i, 1), :] = table_ref[labels_ref[i]]


def _gather_vmem(labels, table):
    batch = labels.shape[0]
    vocab, emb = table.shape
    itemsize = jnp.dtype(table.dtype).itemsize
    return pl.pallas_call(
        _vmem_gather_kernel,
        out_shape=jax.ShapeDtypeStruct((batch, emb), table.dtype),
        in_specs=[
            pl.BlockSpec(memory_space=pltpu.MemorySpace.SMEM),   # labels
            pl.BlockSpec(memory_space=pltpu.MemorySpace.VMEM),   # table
        ],
        out_specs=pl.BlockSpec(memory_space=pltpu.MemorySpace.VMEM),
        cost_estimate=pl.CostEstimate(
            flops=0,
            transcendentals=0,
            bytes_accessed=(vocab + 2 * batch) * emb * itemsize + batch * 4,
        ),
    )(labels, table.reshape(vocab, 1, emb))


# ---------------------------------------------------------------------------
# Fallback path (large tables that should not be VMEM-resident): per-row
# HBM gather driven by scalar-prefetched labels. Only the B referenced rows
# are ever DMA'd; the table never occupies VMEM as a whole.
# ---------------------------------------------------------------------------
def _row_gather_kernel(labels_ref, row_ref, out_ref):
    del labels_ref  # only used inside the BlockSpec index_maps
    out_ref[...] = row_ref[...]


def _gather_hbm(labels, table):
    batch = labels.shape[0]
    vocab, emb = table.shape
    itemsize = jnp.dtype(table.dtype).itemsize
    # Only shard the batch grid across the two v7x TensorCores when there is
    # enough work to hide the per-core fixed launch cost.
    batch_sem = pltpu.PARALLEL if batch >= 256 else pltpu.ARBITRARY
    return pl.pallas_call(
        _row_gather_kernel,
        out_shape=jax.ShapeDtypeStruct((batch, emb), table.dtype),
        grid_spec=pltpu.PrefetchScalarGridSpec(
            num_scalar_prefetch=1,
            grid=(batch,),
            in_specs=[
                pl.BlockSpec((1, emb), lambda i, labels: (labels[i], 0)),
            ],
            out_specs=pl.BlockSpec((1, emb), lambda i, labels: (i, 0)),
        ),
        compiler_params=pltpu.CompilerParams(
            dimension_semantics=(batch_sem,),
            vmem_limit_bytes=32 * 1024 * 1024,
        ),
        cost_estimate=pl.CostEstimate(
            flops=0,
            transcendentals=0,
            bytes_accessed=2 * batch * emb * itemsize + batch * 4,
        ),
    )(labels, table)


# ---------------------------------------------------------------------------
# Wrapper == NodeEmbeddingLayer.forward
# ---------------------------------------------------------------------------
_VMEM_TABLE_BUDGET_BYTES = 8 * 1024 * 1024   # well under 32 MiB scoped / 64 MiB v7x
_MAX_UNROLLED_BATCH = 256                    # keep the static unroll bounded


def node_embedding_layer(node_embedding, node_label, current_context, embedding_table):
    """Pallas implementation of NodeEmbeddingLayer.forward.

    Args:
      node_embedding:  [B, H] float -- passed through untouched (returned twice).
      node_label:      [B] int      -- indices into the embedding table.
      current_context: unused (signature parity with the PyTorch module).
      embedding_table: [op_nums, E] -- the nn.Embedding weight.
    Returns:
      (l_child [B, H], r_child [B, H], node_label_ [B, E])
    """
    del current_context  # unused in the reference forward
    batch = node_embedding.shape[0]
    vocab, emb = embedding_table.shape

    # nn.Embedding raises on out-of-range indices; here we clamp so a bad label
    # can never drive an out-of-bounds VMEM read / DMA (no runtime bounds check).
    labels = jnp.clip(node_label.astype(jnp.int32).reshape(batch), 0, vocab - 1)

    itemsize = jnp.dtype(embedding_table.dtype).itemsize
    lanes = pl.cdiv(emb, 128) * 128
    padded_table_bytes = vocab * 8 * lanes * itemsize  # (V, 1, E) VMEM footprint

    if padded_table_bytes <= _VMEM_TABLE_BUDGET_BYTES and batch <= _MAX_UNROLLED_BATCH:
        gathered = _gather_vmem(labels, embedding_table)
    else:
        gathered = _gather_hbm(labels, embedding_table)

    # l_child and r_child are the unmodified node_embedding -- returned directly
    # (no kernel copy), matching the PyTorch forward which returns the same tensor.
    return node_embedding, node_embedding, gathered


if __name__ == "__main__":
    # Small shapes consistent with the module's forward.
    batch = 8
    hidden = 32          # num_directions * hidden_size
    op_nums = 16
    embedding_size = 32

    key = jax.random.PRNGKey(0)
    k_emb, k_node, k_ctx, k_lab = jax.random.split(key, 4)

    embedding_table = jax.random.normal(k_emb, (op_nums, embedding_size), dtype=jnp.float32)
    node_embedding = jax.random.normal(k_node, (batch, hidden), dtype=jnp.float32)
    current_context = jax.random.normal(k_ctx, (batch, 1, hidden), dtype=jnp.float32)  # unused
    node_label = jax.random.randint(k_lab, (batch,), 0, op_nums, dtype=jnp.int32)

    l_child, r_child, node_label_ = node_embedding_layer(
        node_embedding, node_label, current_context, embedding_table)
    jax.block_until_ready((l_child, r_child, node_label_))

    # Reference check (plain JAX) for semantics parity.
    ref_lab = jnp.take(embedding_table, node_label, axis=0)
    assert l_child.shape == (batch, hidden) and r_child.shape == (batch, hidden)
    assert node_label_.shape == (batch, embedding_size)
    assert jnp.array_equal(l_child, node_embedding)
    assert jnp.array_equal(r_child, node_embedding)
    assert jnp.array_equal(node_label_, ref_lab)      # pure row copy -> bit exact

    # Also exercise the large-table HBM fallback path at the same shapes so
    # both code paths are verified to compile and run.
    hbm_lab = _gather_hbm(node_label, embedding_table)
    jax.block_until_ready(hbm_lab)
    assert jnp.array_equal(hbm_lab, ref_lab)

    print("KERNEL_OK")
</pallas_src>

<mosaic_0001>
module attributes {stable_mosaic.version = 11 : i64} {
  func.func @_vmem_gather_kernel(%arg0: memref<8xi32, #tpu.memory_space<smem>>, %arg1: memref<16x1x32xf32, #tpu.memory_space<vmem>>, %arg2: memref<8x32xf32, #tpu.memory_space<vmem>>) attributes {dimension_semantics = [], scalar_prefetch = 0 : i64, scratch_operands = 0 : i64, tpu.core_type = #tpu.core_type<tc>} {
    %c0 = arith.constant 0 : index
    %0 = memref.load %arg0[%c0] : memref<8xi32, #tpu.memory_space<smem>>
    %1 = arith.index_cast %0 : i32 to index
    %c0_0 = arith.constant 0 : index
    %c0_1 = arith.constant 0 : index
    %2 = vector.load %arg1[%1, %c0_0, %c0_1] : memref<16x1x32xf32, #tpu.memory_space<vmem>>, vector<1x1x32xf32>
    %3 = vector.shape_cast %2 : vector<1x1x32xf32> to vector<1x32xf32>
    %c0_2 = arith.constant 0 : index
    %c0_3 = arith.constant 0 : index
    %4 = vector.load %arg2[%c0_2, %c0_3] : memref<8x32xf32, #tpu.memory_space<vmem>>, vector<1x32xf32>
    tpu.vector_store %arg2[%c0_2, %c0_3], %3 {strides = array<i32>} : memref<8x32xf32, #tpu.memory_space<vmem>>, vector<1x32xf32>,
    %c1 = arith.constant 1 : index
    %5 = memref.load %arg0[%c1] : memref<8xi32, #tpu.memory_space<smem>>
    %6 = arith.index_cast %5 : i32 to index
    %c0_4 = arith.constant 0 : index
    %c0_5 = arith.constant 0 : index
    %7 = vector.load %arg1[%6, %c0_4, %c0_5] : memref<16x1x32xf32, #tpu.memory_space<vmem>>, vector<1x1x32xf32>
    %8 = vector.shape_cast %7 : vector<1x1x32xf32> to vector<1x32xf32>
    %c1_6 = arith.constant 1 : index
    %c0_7 = arith.constant 0 : index
    %9 = vector.load %arg2[%c1_6, %c0_7] : memref<8x32xf32, #tpu.memory_space<vmem>>, vector<1x32xf32>
    tpu.vector_store %arg2[%c1_6, %c0_7], %8 {strides = array<i32>} : memref<8x32xf32, #tpu.memory_space<vmem>>, vector<1x32xf32>,
    %c2 = arith.constant 2 : index
    %10 = memref.load %arg0[%c2] : memref<8xi32, #tpu.memory_space<smem>>
    %11 = arith.index_cast %10 : i32 to index
    %c0_8 = arith.constant 0 : index
    %c0_9 = arith.constant 0 : index
    %12 = vector.load %arg1[%11, %c0_8, %c0_9] : memref<16x1x32xf32, #tpu.memory_space<vmem>>, vector<1x1x32xf32>
    %13 = vector.shape_cast %12 : vector<1x1x32xf32> to vector<1x32xf32>
    %c2_10 = arith.constant 2 : index
    %c0_11 = arith.constant 0 : index
    %14 = vector.load %arg2[%c2_10, %c0_11] : memref<8x32xf32, #tpu.memory_space<vmem>>, vector<1x32xf32>
    tpu.vector_store %arg2[%c2_10, %c0_11], %13 {strides = array<i32>} : memref<8x32xf32, #tpu.memory_space<vmem>>, vector<1x32xf32>,
    %c3 = arith.constant 3 : index
    %15 = memref.load %arg0[%c3] : memref<8xi32, #tpu.memory_space<smem>>
    %16 = arith.index_cast %15 : i32 to index
    %c0_12 = arith.constant 0 : index
    %c0_13 = arith.constant 0 : index
    %17 = vector.load %arg1[%16, %c0_12, %c0_13] : memref<16x1x32xf32, #tpu.memory_space<vmem>>, vector<1x1x32xf32>
    %18 = vector.shape_cast %17 : vector<1x1x32xf32> to vector<1x32xf32>
    %c3_14 = arith.constant 3 : index
    %c0_15 = arith.constant 0 : index
    %19 = vector.load %arg2[%c3_14, %c0_15] : memref<8x32xf32, #tpu.memory_space<vmem>>, vector<1x32xf32>
    tpu.vector_store %arg2[%c3_14, %c0_15], %18 {strides = array<i32>} : memref<8x32xf32, #tpu.memory_space<vmem>>, vector<1x32xf32>,
    %c4 = arith.constant 4 : index
    %20 = memref.load %arg0[%c4] : memref<8xi32, #tpu.memory_space<smem>>
    %21 = arith.index_cast %20 : i32 to index
    %c0_16 = arith.constant 0 : index
    %c0_17 = arith.constant 0 : index
    %22 = vector.load %arg1[%21, %c0_16, %c0_17] : memref<16x1x32xf32, #tpu.memory_space<vmem>>, vector<1x1x32xf32>
    %23 = vector.shape_cast %22 : vector<1x1x32xf32> to vector<1x32xf32>
    %c4_18 = arith.constant 4 : index
    %c0_19 = arith.constant 0 : index
    %24 = vector.load %arg2[%c4_18, %c0_19] : memref<8x32xf32, #tpu.memory_space<vmem>>, vector<1x32xf32>
    tpu.vector_store %arg2[%c4_18, %c0_19], %23 {strides = array<i32>} : memref<8x32xf32, #tpu.memory_space<vmem>>, vector<1x32xf32>,
    %c5 = arith.constant 5 : index
    %25 = memref.load %arg0[%c5] : memref<8xi32, #tpu.memory_space<smem>>
    %26 = arith.index_cast %25 : i32 to index
    %c0_20 = arith.constant 0 : index
    %c0_21 = arith.constant 0 : index
    %27 = vector.load %arg1[%26, %c0_20, %c0_21] : memref<16x1x32xf32, #tpu.memory_space<vmem>>, vector<1x1x32xf32>
    %28 = vector.shape_cast %27 : vector<1x1x32xf32> to vector<1x32xf32>
    %c5_22 = arith.constant 5 : index
    %c0_23 = arith.constant 0 : index
    %29 = vector.load %arg2[%c5_22, %c0_23] : memref<8x32xf32, #tpu.memory_space<vmem>>, vector<1x32xf32>
    tpu.vector_store %arg2[%c5_22, %c0_23], %28 {strides = array<i32>} : memref<8x32xf32, #tpu.memory_space<vmem>>, vector<1x32xf32>,
    %c6 = arith.constant 6 : index
    %30 = memref.load %arg0[%c6] : memref<8xi32, #tpu.memory_space<smem>>
    %31 = arith.index_cast %30 : i32 to index
    %c0_24 = arith.constant 0 : index
    %c0_25 = arith.constant 0 : index
    %32 = vector.load %arg1[%31, %c0_24, %c0_25] : memref<16x1x32xf32, #tpu.memory_space<vmem>>, vector<1x1x32xf32>
    %33 = vector.shape_cast %32 : vector<1x1x32xf32> to vector<1x32xf32>
    %c6_26 = arith.constant 6 : index
    %c0_27 = arith.constant 0 : index
    %34 = vector.load %arg2[%c6_26, %c0_27] : memref<8x32xf32, #tpu.memory_space<vmem>>, vector<1x32xf32>
    tpu.vector_store %arg2[%c6_26, %c0_27], %33 {strides = array<i32>} : memref<8x32xf32, #tpu.memory_space<vmem>>, vector<1x32xf32>,
    %c7 = arith.constant 7 : index
    %35 = memref.load %arg0[%c7] : memref<8xi32, #tpu.memory_space<smem>>
    %36 = arith.index_cast %35 : i32 to index
    %c0_28 = arith.constant 0 : index
    %c0_29 = arith.constant 0 : index
    %37 = vector.load %arg1[%36, %c0_28, %c0_29] : memref<16x1x32xf32, #tpu.memory_space<vmem>>, vector<1x1x32xf32>
    %38 = vector.shape_cast %37 : vector<1x1x32xf32> to vector<1x32xf32>
    %c7_30 = arith.constant 7 : index
    %c0_31 = arith.constant 0 : index
    %39 = vector.load %arg2[%c7_30, %c0_31] : memref<8x32xf32, #tpu.memory_space<vmem>>, vector<1x32xf32>
    tpu.vector_store %arg2[%c7_30, %c0_31], %38 {strides = array<i32>} : memref<8x32xf32, #tpu.memory_space<vmem>>, vector<1x32xf32>,
    return
  }
}

</mosaic_0001>

<llo_original>
// kernel: tpu_custom_call.1
$region0: #{tpu_custom_call.1}
  #allocation0 [shape = 'u32[]', space=smem, size = 0x4, offset = 0x4, fixed_abs, tag = 'smem constant byte address 0x4 - core index']
  #allocation1 [shape = 'u32[72,128]{1,0:T(1,128)}', space=vmem, size = 0x9000, scoped, tag = 'internal scratch']
  %s0 = inlined_call_operand.hbm [shape: s32[8], index: 0, kind: input, shape index: {}]
  %s1 = inlined_call_operand.hbm [shape: f32[16,1,32], index: 1, kind: input, shape index: {}]
  %s2 = inlined_call_operand.hbm [shape: f32[8,32], index: 2, kind: output, shape index: {}]
  %s3 = sld [smem:[#allocation0]]
  $region26: #{tpu_custom_call.1} parent=0
    _
  %s5 = ssub.s32 1, %s3
  %s6 = scalar_select 0, %s5, %s3
  $region1: #{tpu_custom_call.1} parent=0
    #allocation2 [shape = 'u8[512]{0}', space=smem, size = 0x200, scoped, tag = 'input window, operand 0, single buffered']
    #allocation3 [shape = 's32[1]{0}', space=sflag, size = 0x4, scoped, tag = 'scoped memory for tpu_custom_call.1']
    #allocation4 [shape = 's32[1]{0}', space=sflag, size = 0x4, scoped, tag = 'scoped memory for tpu_custom_call.1']
    #allocation5 [shape = 's32[1]{0}', space=sflag, size = 0x4, scoped, tag = 'scoped memory for tpu_custom_call.1']
    #allocation6 [shape = 'u8[8192]{0}', space=vmem, size = 0x2000, scoped, tag = 'input window, operand 1, single buffered']
    #allocation7 [shape = 'u8[4096]{0}', space=vmem, size = 0x1000, scoped, tag = 'output window, operand 0, single buffered']
    %7 = vsyncpa [#allocation5], 0
    %8 = vsyncpa [#allocation3], 0
    %9 = vsyncpa [#allocation4], 0
    // Predicated region
    $region2: #{tpu_custom_call.1} parent=1 // pred_check
      _
    $region3: #{tpu_custom_call.1} parent=1 // pred_check_branch
      %11 = sbr.rel (0) target = $region5
    $region4: #{tpu_custom_call.1} parent=1 // pred_region
      %13 = vsyncadd [#allocation5], 0
      %s15 = sshll.u32 %s0, 4
      %s16 = int_to_ptr.hbm [resolvable:$true] %s15
      %18 = dma.hbm_to_smem %s16, 16, [#allocation2], [#allocation5]
    $region5: #{tpu_custom_call.1} parent=1 // pred_fallthru
      _
    // Predicated region
    $region6: #{tpu_custom_call.1} parent=1 // pred_check
      _
    $region7: #{tpu_custom_call.1} parent=1 // pred_check_branch
      %20 = sbr.rel (0) target = $region9
    $region8: #{tpu_custom_call.1} parent=1 // pred_region
      %22 = vsyncadd [#allocation3], 0
      %s23 = sshll.u32 %s1, 4
      %s24 = int_to_ptr.hbm [resolvable:$true] %s23
      %s25 = sshll.u32 [#allocation6], 4
      %s26 = int_to_ptr.vmem [resolvable:$true] %s25
      %31 = dma.hbm_to_vmem [thread:$0]  %s24, 256, %s26, [#allocation3], 16, 16, 1
    $region9: #{tpu_custom_call.1} parent=1 // pred_fallthru
      _
    // Predicated region
    $region10: #{tpu_custom_call.1} parent=1 // pred_check
      _
    $region11: #{tpu_custom_call.1} parent=1 // pred_check_branch
      %33 = sbr.rel (0) target = $region13
    $region12: #{tpu_custom_call.1} parent=1 // pred_region
      %35 = dma.done [#allocation5], 16
    $region13: #{tpu_custom_call.1} parent=1 // pred_fallthru
      _
    // Predicated region
    $region14: #{tpu_custom_call.1} parent=1 // pred_check
      _
    $region15: #{tpu_custom_call.1} parent=1 // pred_check_branch
      %37 = sbr.rel (0) target = $region17
    $region16: #{tpu_custom_call.1} parent=1 // pred_region
      %39 = dma.done [#allocation3], 256
    $region17: #{tpu_custom_call.1} parent=1 // pred_fallthru
      _
    %40 = sfence
    %s41 = sld [smem:[#allocation2]]
    %s42 = scalar_lea.vmem [#allocation6], %s41
    %v43 = vld [vmem:[%s42] sm:$0x1]
    %vm44 = vcmask 253952
    %45 = vst.msk [vmem:[#allocation7] sm:$0x1] %vm44, %v43
    %s46 = sld [smem:[#allocation2 + $0x1]]
    %s47 = scalar_lea.vmem [#allocation6], %s46
    %v48 = vld [vmem:[%s47] sm:$0x1]
    %49 = vst.msk [vmem:[#allocation7 + $0x1] sm:$0x1] %vm44, %v48
    %s50 = sld [smem:[#allocation2 + $0x2]]
    %s51 = scalar_lea.vmem [#allocation6], %s50
    %v52 = vld [vmem:[%s51] sm:$0x1]
    %53 = vst.msk [vmem:[#allocation7 + $0x2] sm:$0x1] %vm44, %v52
    %s54 = sld [smem:[#allocation2 + $0x3]]
    %s55 = scalar_lea.vmem [#allocation6], %s54
    %v56 = vld [vmem:[%s55] sm:$0x1]
    %57 = vst.msk [vmem:[#allocation7 + $0x3] sm:$0x1] %vm44, %v56
    %s58 = sld [smem:[#allocation2 + $0x4]]
    %s59 = scalar_lea.vmem [#allocation6], %s58
    %v60 = vld [vmem:[%s59] sm:$0x1]
    %61 = vst.msk [vmem:[#allocation7 + $0x4] sm:$0x1] %vm44, %v60
    %s62 = sld [smem:[#allocation2 + $0x5]]
    %s63 = scalar_lea.vmem [#allocation6], %s62
    %v64 = vld [vmem:[%s63] sm:$0x1]
    %65 = vst.msk [vmem:[#allocation7 + $0x5] sm:$0x1] %vm44, %v64
    %s66 = sld [smem:[#allocation2 + $0x6]]
    %s67 = scalar_lea.vmem [#allocation6], %s66
    %v68 = vld [vmem:[%s67] sm:$0x1]
    %69 = vst.msk [vmem:[#allocation7 + $0x6] sm:$0x1] %vm44, %v68
    %s70 = sld [smem:[#allocation2 + $0x7]]
    %s71 = scalar_lea.vmem [#allocation6], %s70
    %v72 = vld [vmem:[%s71] sm:$0x1]
    %73 = vst.msk [vmem:[#allocation7 + $0x7] sm:$0x1] %vm44, %v72
    // Predicated region
    $region18: #{tpu_custom_call.1} parent=1 // pred_check
      _
    $region19: #{tpu_custom_call.1} parent=1 // pred_check_branch
      %75 = sbr.rel (0) target = $region21
    $region20: #{tpu_custom_call.1} parent=1 // pred_region
      %77 = vsyncadd [#allocation4], 0
      %s79 = sshll.u32 [#allocation7], 4
      %s80 = int_to_ptr.vmem [resolvable:$true] %s79
      %s81 = sshll.u32 %s2, 4
      %s82 = int_to_ptr.hbm [resolvable:$true] %s81
      %84 = dma.vmem_to_hbm [thread:$0]  %s80, 128, %s82, [#allocation4]
    $region21: #{tpu_custom_call.1} parent=1 // pred_fallthru
      _
    // Predicated region
    $region22: #{tpu_custom_call.1} parent=1 // pred_check
      _
    $region23: #{tpu_custom_call.1} parent=1 // pred_check_branch
      %86 = sbr.rel (0) target = $region25
    $region24: #{tpu_custom_call.1} parent=1 // pred_region
      %88 = dma.done [#allocation4], 128
    $region25: #{tpu_custom_call.1} parent=1 // pred_fallthru
      _
    %89 = vsyncpa [#allocation3], 1
    %90 = vsyncpa [#allocation4], 1
    %91 = vsyncpa [#allocation5], 1

</llo_original>
